<compile_context>
chip_gen: v6e
topology: v6e:2x2x1
jax: 0.10.0
libtpu: 0.0.40
codegen_flags: <defaults>
</compile_context>

<pallas_src>
import functools

import jax
import jax.numpy as jnp
from jax.experimental import pallas as pl
from jax.experimental.pallas import tpu as pltpu


# ----------------------------------------------------------------------------
# Generic fused kernel: out = [relu]( (W @ Xcol) * scale + shift ) [+ residual]
# ----------------------------------------------------------------------------
def _matmul_affine_kernel(w_ref, scale_ref, shift_ref, x_ref, *rest, relu, has_res):
    if has_res:
        res_ref, o_ref = rest
    else:
        (o_ref,) = rest

    # (Co, K) @ (K, TS) -> f32 accumulation on the MXU.
    acc = jnp.dot(w_ref[...], x_ref[0], preferred_element_type=jnp.float32)

    # Fused epilogue: conv bias + BatchNorm(eval) folded into per-channel
    # scale/shift, optional ReLU, optional residual add.
    y = acc * scale_ref[...] + shift_ref[...]
    if relu:
        y = jnp.maximum(y, 0.0)
    if has_res:
        y = y + res_ref[0].astype(jnp.float32)
    o_ref[0] = y.astype(o_ref.dtype)


def _pick_spatial_tile(S, K, itemsize, budget_bytes=4 * 1024 * 1024):
    """Largest lane-dense (multiple-of-128) divisor of S that keeps one
    (K, TS) input tile under ~4 MiB (double-buffer friendly on v7x 64 MiB VMEM)."""
    max_lanes = max(128, (budget_bytes // max(1, K * itemsize)) // 128 * 128)
    max_lanes = min(max_lanes, 4096)
    if S % 128 == 0:
        ts = min(max_lanes, S)
        ts -= ts % 128
        while ts >= 128:
            if S % ts == 0:
                return ts
            ts -= 128
    return S  # fallback: full spatial extent (always a legal block shape)


def _fused_channel_matmul(xcol, w2d, scale, shift, *, relu, residual=None,
                          out_dtype):
    """xcol: (B, K, S), w2d: (Co, K), scale/shift: (Co,). Returns (B, Co, S)."""
    B, K, S = xcol.shape
    Co = w2d.shape[0]
    TS = _pick_spatial_tile(S, K, jnp.dtype(xcol.dtype).itemsize)
    grid = (B, S // TS)

    w2d = w2d.astype(xcol.dtype)
    scale2 = scale.reshape(Co, 1).astype(jnp.float32)
    shift2 = shift.reshape(Co, 1).astype(jnp.float32)

    in_specs = [
        pl.BlockSpec((Co, K), lambda b, si: (0, 0)),          # weights
        pl.BlockSpec((Co, 1), lambda b, si: (0, 0)),          # per-channel scale
        pl.BlockSpec((Co, 1), lambda b, si: (0, 0)),          # per-channel shift
        pl.BlockSpec((1, K, TS), lambda b, si: (b, 0, si)),   # im2col tile
    ]
    operands = [w2d, scale2, shift2, xcol]
    if residual is not None:
        in_specs.append(pl.BlockSpec((1, Co, TS), lambda b, si: (b, 0, si)))
        operands.append(residual)

    kernel = functools.partial(_matmul_affine_kernel, relu=relu,
                               has_res=residual is not None)

    return pl.pallas_call(
        kernel,
        out_shape=jax.ShapeDtypeStruct((B, Co, S), out_dtype),
        grid=grid,
        in_specs=in_specs,
        out_specs=pl.BlockSpec((1, Co, TS), lambda b, si: (b, 0, si)),
        compiler_params=pltpu.CompilerParams(
            dimension_semantics=("parallel", "parallel")),
    )(*operands)


# ----------------------------------------------------------------------------
# Layout plumbing (XLA): im2col, dilation, padding, concat
# ----------------------------------------------------------------------------
def _im2col_3d(x, kd, kh, kw):
    """x: (B, C, D, H, W) already padded, stride 1. Returns ((B, C*T, S), out_sp)."""
    B, C, D, H, W = x.shape
    Do, Ho, Wo = D - kd + 1, H - kh + 1, W - kw + 1
    cols = []
    for a in range(kd):
        for b in range(kh):
            for c in range(kw):
                cols.append(x[:, :, a:a + Do, b:b + Ho, c:c + Wo])
    col = jnp.stack(cols, axis=2)                    # (B, C, T, Do, Ho, Wo)
    return col.reshape(B, C * kd * kh * kw, Do * Ho * Wo), (Do, Ho, Wo)


def _fold_bn(bias, gamma, beta, mean, var, eps=1e-5):
    scale = gamma * jax.lax.rsqrt(var + eps)
    shift = scale * (bias - mean) + beta
    return scale.astype(jnp.float32), shift.astype(jnp.float32)


def _conv3d_block(x, params):
    """The `Conv3d` residual block: relu(bn(conv2(relu(bn(conv1(x)))))) + res(x)."""
    B, Cin, D, H, W = x.shape
    Co = params["w1"].shape[0]
    S = D * H * W
    dt = x.dtype

    s1, t1 = _fold_bn(params["b1"], params["g1"], params["beta1"],
                      params["m1"], params["v1"])
    s2, t2 = _fold_bn(params["b2"], params["g2"], params["beta2"],
                      params["m2"], params["v2"])

    # residual: 1x1x1 conv (no bias, no activation) -> plain channel matmul
    res = _fused_channel_matmul(
        x.reshape(B, Cin, S), params["w_res"].reshape(Co, Cin),
        jnp.ones((Co,), jnp.float32), jnp.zeros((Co,), jnp.float32),
        relu=False, out_dtype=jnp.float32)

    # conv1 (3x3x3, pad 1) + BN1 + ReLU
    xp = jnp.pad(x, ((0, 0), (0, 0), (1, 1), (1, 1), (1, 1)))
    xcol, _ = _im2col_3d(xp, 3, 3, 3)
    h1 = _fused_channel_matmul(xcol, params["w1"].reshape(Co, Cin * 27),
                               s1, t1, relu=True, out_dtype=dt)
    h1 = h1.reshape(B, Co, D, H, W)

    # conv2 (3x3x3, pad 1) + BN2 + ReLU, fused with the residual add
    h1p = jnp.pad(h1, ((0, 0), (0, 0), (1, 1), (1, 1), (1, 1)))
    h1col, _ = _im2col_3d(h1p, 3, 3, 3)
    out = _fused_channel_matmul(h1col, params["w2"].reshape(Co, Co * 27),
                                s2, t2, relu=True, residual=res, out_dtype=dt)
    return out.reshape(B, Co, D, H, W)


def up_forward(x1, x2, params):
    """Pallas forward pass of Up(x1_in, x2_in, out_channel, k, s, p)."""
    k, s, p = params["k"], params["s"], params["p"]
    dt = x1.dtype

    # --- self.up: ConvTranspose3d(x1_in, x1_in, k, s, p) + ReLU --------------
    # Equivalent to: zero-insert (stride) dilation, pad by (k-1-p), then a
    # stride-1 cross-correlation with the in/out-swapped, spatially-flipped kernel.
    B, C1, D1, H1, W1 = x1.shape
    Dd, Hd, Wd = (D1 - 1) * s + 1, (H1 - 1) * s + 1, (W1 - 1) * s + 1
    xd = jnp.zeros((B, C1, Dd, Hd, Wd), dt).at[:, :, ::s, ::s, ::s].set(x1)
    pad = k - 1 - p
    if pad >= 0:
        xdp = jnp.pad(xd, ((0, 0), (0, 0), (pad, pad), (pad, pad), (pad, pad)))
    else:
        c = -pad
        xdp = xd[:, :, c:Dd - c, c:Hd - c, c:Wd - c]
    w_up = jnp.flip(params["w_up"], axis=(2, 3, 4)).transpose(1, 0, 2, 3, 4)
    xcol, sp1 = _im2col_3d(xdp, k, k, k)
    up = _fused_channel_matmul(
        xcol, w_up.reshape(C1, C1 * k ** 3),
        jnp.ones((C1,), jnp.float32), params["b_up"].astype(jnp.float32),
        relu=True, out_dtype=dt)
    x1u = up.reshape(B, C1, *sp1)

    # --- F.pad(x1, [dC//2, dC-dC//2, dX//2, dX-dX//2, dY//2, dY-dY//2]) ------
    # Faithful to the source ordering: W gets the depth diff, H the width diff,
    # D the height diff (a quirk of the original module).
    diffC = x2.shape[2] - x1u.shape[2]
    diffY = x2.shape[3] - x1u.shape[3]
    diffX = x2.shape[4] - x1u.shape[4]
    x1u = jnp.pad(x1u, ((0, 0), (0, 0),
                        (diffY // 2, diffY - diffY // 2),
                        (diffX // 2, diffX - diffX // 2),
                        (diffC // 2, diffC - diffC // 2)))

    # --- concat + residual Conv3d block --------------------------------------
    x = jnp.concatenate([x2, x1u], axis=1)
    return _conv3d_block(x, params)


# ----------------------------------------------------------------------------
# Pure-JAX reference (XLA convolutions) mirroring the PyTorch module
# ----------------------------------------------------------------------------
def _reference_up(x1, x2, params):
    k, s, p = params["k"], params["s"], params["p"]
    dn = ("NCDHW", "OIDHW", "NCDHW")
    hi = jax.lax.Precision.HIGHEST

    w_up = jnp.flip(params["w_up"], axis=(2, 3, 4)).transpose(1, 0, 2, 3, 4)
    up = jax.lax.conv_general_dilated(
        x1, w_up, window_strides=(1, 1, 1),
        padding=[(k - 1 - p, k - 1 - p)] * 3, lhs_dilation=(s, s, s),
        dimension_numbers=dn, precision=hi)
    up = jax.nn.relu(up + params["b_up"][None, :, None, None, None])

    diffC = x2.shape[2] - up.shape[2]
    diffY = x2.shape[3] - up.shape[3]
    diffX = x2.shape[4] - up.shape[4]
    up = jnp.pad(up, ((0, 0), (0, 0),
                      (diffY // 2, diffY - diffY // 2),
                      (diffX // 2, diffX - diffX // 2),
                      (diffC // 2, diffC - diffC // 2)))
    x = jnp.concatenate([x2, up], axis=1)

    def bn(z, g, b, m, v, eps=1e-5):
        sh = (None, slice(None), None, None, None)
        return g[sh] * (z - m[sh]) * jax.lax.rsqrt(v + eps)[sh] + b[sh]

    h = jax.lax.conv_general_dilated(x, params["w1"], (1, 1, 1), [(1, 1)] * 3,
                                     dimension_numbers=dn, precision=hi)
    h = jax.nn.relu(bn(h + params["b1"][None, :, None, None, None],
                       params["g1"], params["beta1"], params["m1"], params["v1"]))
    h2 = jax.lax.conv_general_dilated(h, params["w2"], (1, 1, 1), [(1, 1)] * 3,
                                      dimension_numbers=dn, precision=hi)
    h2 = jax.nn.relu(bn(h2 + params["b2"][None, :, None, None, None],
                        params["g2"], params["beta2"], params["m2"], params["v2"]))
    res = jax.lax.conv_general_dilated(x, params["w_res"], (1, 1, 1), [(0, 0)] * 3,
                                       dimension_numbers=dn, precision=hi)
    return h2 + res


# ----------------------------------------------------------------------------
if __name__ == "__main__":
    key = jax.random.PRNGKey(0)
    keys = jax.random.split(key, 20)

    # Small shapes consistent with the module: Up(x1_in=8, x2_in=8, out=16, k=2, s=2, p=0)
    B = 2
    x1_in, x2_in, out_ch = 8, 8, 16
    k, s, p = 2, 2, 0
    x1 = jax.random.normal(keys[0], (B, x1_in, 4, 4, 4), jnp.float32)
    x2 = jax.random.normal(keys[1], (B, x2_in, 8, 8, 8), jnp.float32)
    cin = x1_in + x2_in

    def _winit(k_, shape, fan_in):
        return jax.random.normal(k_, shape, jnp.float32) * (0.5 * float(fan_in) ** -0.5)

    params = {
        "k": k, "s": s, "p": p,
        # ConvTranspose3d weight layout: (in_channels, out_channels, kD, kH, kW)
        "w_up": _winit(keys[2], (x1_in, x1_in, k, k, k), x1_in * k ** 3),
        "b_up": 0.1 * jax.random.normal(keys[3], (x1_in,), jnp.float32),
        # Conv3d block weights: (out, in, 3, 3, 3)
        "w1": _winit(keys[4], (out_ch, cin, 3, 3, 3), cin * 27),
        "b1": 0.1 * jax.random.normal(keys[5], (out_ch,), jnp.float32),
        "g1": 0.8 + 0.4 * jax.random.uniform(keys[6], (out_ch,), jnp.float32),
        "beta1": 0.1 * jax.random.normal(keys[7], (out_ch,), jnp.float32),
        "m1": 0.1 * jax.random.normal(keys[8], (out_ch,), jnp.float32),
        "v1": 0.5 + jax.random.uniform(keys[9], (out_ch,), jnp.float32),
        "w2": _winit(keys[10], (out_ch, out_ch, 3, 3, 3), out_ch * 27),
        "b2": 0.1 * jax.random.normal(keys[11], (out_ch,), jnp.float32),
        "g2": 0.8 + 0.4 * jax.random.uniform(keys[12], (out_ch,), jnp.float32),
        "beta2": 0.1 * jax.random.normal(keys[13], (out_ch,), jnp.float32),
        "m2": 0.1 * jax.random.normal(keys[14], (out_ch,), jnp.float32),
        "v2": 0.5 + jax.random.uniform(keys[15], (out_ch,), jnp.float32),
        "w_res": _winit(keys[16], (out_ch, cin, 1, 1, 1), cin),
    }

    out = up_forward(x1, x2, params)
    out = jax.block_until_ready(out)

    ref = _reference_up(x1, x2, params)
    assert out.shape == ref.shape == (B, out_ch, 8, 8, 8)
    max_err = float(jnp.max(jnp.abs(out - ref)))
    assert jnp.allclose(out, ref, atol=5e-3, rtol=5e-3), f"max abs err {max_err}"

    print("KERNEL_OK")
</pallas_src>

<mosaic_0001>
module attributes {stable_mosaic.version = 11 : i64} {
  func.func @_matmul_affine_kernel(%arg0: i32, %arg1: i32, %arg2: memref<8x64xf32, #tpu.memory_space<vmem>>, %arg3: memref<8x1xf32, #tpu.memory_space<vmem>>, %arg4: memref<8x1xf32, #tpu.memory_space<vmem>>, %arg5: memref<1x64x512xf32, #tpu.memory_space<vmem>>, %arg6: memref<1x8x512xf32, #tpu.memory_space<vmem>>) attributes {dimension_semantics = [#tpu.dimension_semantics<parallel>, #tpu.dimension_semantics<parallel>], iteration_bounds = array<i64: 2, 1>, scalar_prefetch = 0 : i64, scratch_operands = 0 : i64, tpu.core_type = #tpu.core_type<tc>, window_params = [{pipeline_mode = #tpu.pipeline_mode<synchronous>, transform_indices = @transform_0, window_bounds = array<i64: 8, 64>}, {pipeline_mode = #tpu.pipeline_mode<synchronous>, transform_indices = @transform_1, window_bounds = array<i64: 8, 1>}, {pipeline_mode = #tpu.pipeline_mode<synchronous>, transform_indices = @transform_2, window_bounds = array<i64: 8, 1>}, {transform_indices = @transform_3, window_bounds = array<i64: 1, 64, 512>}, {transform_indices = @transform_4, window_bounds = array<i64: 1, 8, 512>}]} {
    %c0 = arith.constant 0 : index
    %c0_0 = arith.constant 0 : index
    %0 = vector.load %arg2[%c0, %c0_0] : memref<8x64xf32, #tpu.memory_space<vmem>>, vector<8x64xf32>
    %c0_1 = arith.constant 0 : index
    %c0_2 = arith.constant 0 : index
    %c0_3 = arith.constant 0 : index
    %1 = vector.load %arg5[%c0_1, %c0_2, %c0_3] : memref<1x64x512xf32, #tpu.memory_space<vmem>>, vector<1x64x512xf32>
    %2 = vector.shape_cast %1 : vector<1x64x512xf32> to vector<64x512xf32>
    %cst = arith.constant dense<0.000000e+00> : vector<8x512xf32>
    %3 = tpu.matmul %0, %2, %cst {dimension_numbers = #tpu.dot_dimension_numbers<[1], [0], [0], [1], [0, 0, 1, 1], [], []>} : vector<8x64xf32>, vector<64x512xf32>, vector<8x512xf32> -> vector<8x512xf32>
    %c0_4 = arith.constant 0 : index
    %c0_5 = arith.constant 0 : index
    %4 = vector.load %arg3[%c0_4, %c0_5] : memref<8x1xf32, #tpu.memory_space<vmem>>, vector<8x1xf32>
    %5 = vector.broadcast %4 : vector<8x1xf32> to vector<8x512xf32>
    %6 = arith.mulf %3, %5 : vector<8x512xf32>
    %c0_6 = arith.constant 0 : index
    %c0_7 = arith.constant 0 : index
    %7 = vector.load %arg4[%c0_6, %c0_7] : memref<8x1xf32, #tpu.memory_space<vmem>>, vector<8x1xf32>
    %8 = vector.broadcast %7 : vector<8x1xf32> to vector<8x512xf32>
    %9 = arith.addf %6, %8 : vector<8x512xf32>
    %cst_8 = arith.constant 0.000000e+00 : f32
    %10 = vector.broadcast %cst_8 : f32 to vector<8x512xf32>
    %11 = arith.maximumf %9, %10 : vector<8x512xf32>
    %c0_9 = arith.constant 0 : index
    %c0_10 = arith.constant 0 : index
    %c0_11 = arith.constant 0 : index
    %12 = vector.load %arg6[%c0_9, %c0_10, %c0_11] : memref<1x8x512xf32, #tpu.memory_space<vmem>>, vector<1x8x512xf32>
    %13 = vector.shape_cast %12 : vector<1x8x512xf32> to vector<8x512xf32>
    %14 = vector.shape_cast %11 : vector<8x512xf32> to vector<1x8x512xf32>
    tpu.vector_store %arg6[%c0_9, %c0_10, %c0_11], %14 {strides = array<i32>} : memref<1x8x512xf32, #tpu.memory_space<vmem>>, vector<1x8x512xf32>,
    return
  }
  func.func @transform_0(%arg0: i32, %arg1: i32) -> (i32, i32) {
    %c0_i32 = arith.constant 0 : i32
    %c0_i32_0 = arith.constant 0 : i32
    %c0_i32_1 = arith.constant 0 : i32
    return %c0_i32, %c0_i32_0 : i32, i32
  }
  func.func @transform_1(%arg0: i32, %arg1: i32) -> (i32, i32) {
    %c0_i32 = arith.constant 0 : i32
    %c0_i32_0 = arith.constant 0 : i32
    %c0_i32_1 = arith.constant 0 : i32
    return %c0_i32, %c0_i32_0 : i32, i32
  }
  func.func @transform_2(%arg0: i32, %arg1: i32) -> (i32, i32) {
    %c0_i32 = arith.constant 0 : i32
    %c0_i32_0 = arith.constant 0 : i32
    %c0_i32_1 = arith.constant 0 : i32
    return %c0_i32, %c0_i32_0 : i32, i32
  }
  func.func @transform_3(%arg0: i32, %arg1: i32) -> (i32, i32, i32) {
    %c0_i32 = arith.constant 0 : i32
    %c0_i32_0 = arith.constant 0 : i32
    return %arg0, %c0_i32, %arg1 : i32, i32, i32
  }
  func.func @transform_4(%arg0: i32, %arg1: i32) -> (i32, i32, i32) {
    %c0_i32 = arith.constant 0 : i32
    %c0_i32_0 = arith.constant 0 : i32
    return %arg0, %c0_i32, %arg1 : i32, i32, i32
  }
}

</mosaic_0001>

<llo_original>
// kernel: tpu_custom_call.1
$region0: #{tpu_custom_call.1}
  #allocation0 [shape = 'u32[]', space=smem, size = 0x4, offset = 0x4, fixed_abs, tag = 'smem constant byte address 0x4 - core index']
  #allocation1 [shape = 'u32[144,128]{1,0:T(1,128)}', space=vmem, size = 0x12000, scoped, tag = 'internal scratch']
  %s0 = inlined_call_operand.vmem [shape: f32[8,64], index: 0, kind: input, shape index: {}]
  %s1 = inlined_call_operand.vmem [shape: f32[8,1], index: 1, kind: input, shape index: {}]
  %s2 = inlined_call_operand.vmem [shape: f32[8,1], index: 2, kind: input, shape index: {}]
  %s3 = inlined_call_operand.hbm [shape: f32[2,64,512], index: 3, kind: input, shape index: {}]
  %s4 = inlined_call_operand.hbm [shape: f32[2,8,512], index: 4, kind: output, shape index: {}]
  %s5 = sld [smem:[#allocation0]]
  $region53: #{tpu_custom_call.1} parent=0
    _
  %s7 = ssub.s32 1, %s5
  %s8 = scalar_select 0, %s7, %s5
  $region1: #{tpu_custom_call.1} parent=0
    #allocation2 [shape = 'u8[262144]{0}', space=vmem, size = 0x40000, scoped, tag = 'input window, operand 3']
    #allocation3 [shape = 's32[2]{0}', space=sflag, size = 0x8, scoped, tag = 'scoped memory for tpu_custom_call.1']
    #allocation4 [shape = 's32[2]{0}', space=sflag, size = 0x8, scoped, tag = 'scoped memory for tpu_custom_call.1']
    #allocation5 [shape = 'u8[32768]{0}', space=vmem, size = 0x8000, scoped, tag = 'output window, operand 0']
    %9 = vsyncpa [#allocation3], 0
    %s10 = scalar_lea.sflag [#allocation3], 1
    %11 = vsyncpa %s10, 0
    %12 = vsyncpa [#allocation4], 0
    %s13 = scalar_lea.sflag [#allocation4], 1
    %14 = vsyncpa %s13, 0
    loop: start=0, step=1, limit=4
    $region2: #{tpu_custom_call.1} parent=1 // loop_pre_header
      _
    $region3: #{tpu_custom_call.1} parent=1 // loop_header
      %s16 = sphi 0, %s20
      %p17 = scmp.ge.s32.totalorder %s16, 4
      %s23 = sphi 0, %s35
      %s24 = sphi 0, %s31
      %s25 = sphi 0, %s23
      %s26 = sphi 0, %s24
      %s27 = sphi 0, %s25
      %s28 = sphi 0, %s26
      %s36 = sphi 0, %s36
      %s38 = sphi 0, %s36
      %s39 = sphi 0, %s38
      %s53 = sphi 0, %s39
      %s57 = sphi 0, %s57
      %s59 = sphi 0, %s57
      %s60 = sphi 0, %s59
      %s74 = sphi 0, %s60
      %s78 = sphi 0, %s78
      %s80 = sphi 0, %s78
      %s81 = sphi 0, %s80
      %s95 = sphi 0, %s81
      %s103 = sphi 0, %s105
      %s106 = sphi 0, %s103
      %s107 = sphi 0, %s106
      %s123 = sphi 0, %s107
      %s131 = sphi 0, %s133
      %s134 = sphi 0, %s131
      %s135 = sphi 0, %s134
      %s151 = sphi 0, %s135
    $region4: #{tpu_custom_call.1} parent=1 // loop_header_branch
      %19 = sbr.rel (%p17) target = $region8
    $region5: #{tpu_custom_call.1} parent=1 // loop_body
      %s21 = ssub.s32 %s16, 1
      %s22 = ssub.s32 %s16, 2
      %s29 = sadd.s32 1, %s24
      %p30 = scmp.ge.s32.totalorder %s29, 1
      %s31 = scalar_select %p30, 0, %s29
      %s32 = sadd.s32 1, %s23
      %s33 = scalar_select %p30, %s32, %s23
      %p34 = scmp.ge.s32.totalorder %s33, 2
      %s35 = scalar_select %p34, 0, %s33
      %s37 = sadd.s32 %s36, 1
      %p40 = scmp.eq.s32.totalorder %s16, 1
      %p41 = scmp.ne.s32.totalorder %s36, %s38
      %p42 = scmp.eq.s32.totalorder %s16, 0
      %p43 = por %p41, %p42
      %p44 = scmp.ne.s32.totalorder %s36, %s38
      %p45 = scmp.eq.s32.totalorder %s21, 1
      %p46 = por %p44, %p45
      %p47 = scmp.ne.s32.totalorder %s38, %s39
      %p48 = scmp.eq.s32.totalorder %s21, 0
      %p49 = por %p47, %p48
      %p50 = scmp.ne.s32.totalorder %s38, %s39
      %p51 = scmp.eq.s32.totalorder %s22, 1
      %p52 = por %p50, %p51
      %p54 = scmp.ne.s32.totalorder %s39, %s53
      %p55 = scmp.eq.s32.totalorder %s22, 0
      %p56 = por %p54, %p55
      %s58 = sadd.s32 %s57, 1
      %p61 = scmp.eq.s32.totalorder %s16, 1
      %p62 = scmp.ne.s32.totalorder %s57, %s59
      %p63 = scmp.eq.s32.totalorder %s16, 0
      %p64 = por %p62, %p63
      %p65 = scmp.ne.s32.totalorder %s57, %s59
      %p66 = scmp.eq.s32.totalorder %s21, 1
      %p67 = por %p65, %p66
      %p68 = scmp.ne.s32.totalorder %s59, %s60
      %p69 = scmp.eq.s32.totalorder %s21, 0
      %p70 = por %p68, %p69
      %p71 = scmp.ne.s32.totalorder %s59, %s60
      %p72 = scmp.eq.s32.totalorder %s22, 1
      %p73 = por %p71, %p72
      %p75 = scmp.ne.s32.totalorder %s60, %s74
      %p76 = scmp.eq.s32.totalorder %s22, 0
      %p77 = por %p75, %p76
      %s79 = sadd.s32 %s78, 1
      %p82 = scmp.eq.s32.totalorder %s16, 1
      %p83 = scmp.ne.s32.totalorder %s78, %s80
      %p84 = scmp.eq.s32.totalorder %s16, 0
      %p85 = por %p83, %p84
      %p86 = scmp.ne.s32.totalorder %s78, %s80
      %p87 = scmp.eq.s32.totalorder %s21, 1
      %p88 = por %p86, %p87
      %p89 = scmp.ne.s32.totalorder %s80, %s81
      %p90 = scmp.eq.s32.totalorder %s21, 0
      %p91 = por %p89, %p90
      %p92 = scmp.ne.s32.totalorder %s80, %s81
      %p93 = scmp.eq.s32.totalorder %s22, 1
      %p94 = por %p92, %p93
      %p96 = scmp.ne.s32.totalorder %s81, %s95
      %p97 = scmp.eq.s32.totalorder %s22, 0
      %p98 = por %p96, %p97
      %s99 = ssub.s32 %s23, %s35
      %s100 = ssub.s32 %s24, %s31
      %s101 = sor.u32 %s99, %s100
      %p102 = scmp.eq.s32.totalorder %s101, 0
      %s104 = sadd.s32 %s103, 1
      %s105 = scalar_select %p102, %s103, %s104
      %p108 = pneg %p102
      %p109 = scmp.eq.s32.totalorder %s16, 1
      %p110 = por %p108, %p109
      %p111 = scmp.ne.s32.totalorder %s103, %s106
      %p112 = scmp.eq.s32.totalorder %s16, 0
      %p113 = por %p111, %p112
      %p114 = scmp.ne.s32.totalorder %s103, %s106
      %p115 = scmp.eq.s32.totalorder %s21, 1
      %p116 = por %p114, %p115
      %p117 = scmp.ne.s32.totalorder %s106, %s107
      %p118 = scmp.eq.s32.totalorder %s21, 0
      %p119 = por %p117, %p118
      %p120 = scmp.ne.s32.totalorder %s106, %s107
      %p121 = scmp.eq.s32.totalorder %s22, 1
      %p122 = por %p120, %p121
      %p124 = scmp.ne.s32.totalorder %s107, %s123
      %p125 = scmp.eq.s32.totalorder %s22, 0
      %p126 = por %p124, %p125
      %s127 = ssub.s32 %s23, %s35
      %s128 = ssub.s32 %s24, %s31
      %s129 = sor.u32 %s127, %s128
      %p130 = scmp.eq.s32.totalorder %s129, 0
      %s132 = sadd.s32 %s131, 1
      %s133 = scalar_select %p130, %s131, %s132
      %p136 = pneg %p130
      %p137 = scmp.eq.s32.totalorder %s16, 1
      %p138 = por %p136, %p137
      %p139 = scmp.ne.s32.totalorder %s131, %s134
      %p140 = scmp.eq.s32.totalorder %s16, 0
      %p141 = por %p139, %p140
      %p142 = scmp.ne.s32.totalorder %s131, %s134
      %p143 = scmp.eq.s32.totalorder %s21, 1
      %p144 = por %p142, %p143
      %p145 = scmp.ne.s32.totalorder %s134, %s135
      %p146 = scmp.eq.s32.totalorder %s21, 0
      %p147 = por %p145, %p146
      %p148 = scmp.ne.s32.totalorder %s134, %s135
      %p149 = scmp.eq.s32.totalorder %s22, 1
      %p150 = por %p148, %p149
      %p152 = scmp.ne.s32.totalorder %s135, %s151
      %p153 = scmp.eq.s32.totalorder %s22, 0
      %p154 = por %p152, %p153
      %p155 = scmp.le.s32.totalorder 1, %s16
      %p156 = scmp.lt.s32.totalorder %s16, 3
      %p157 = pnand %p155, %p156
      %p158 = pneg %p157
      // Predicated region
      $region9: #{tpu_custom_call.1} parent=5 // pred_check
        _
      $region10: #{tpu_custom_call.1} parent=5 // pred_check_branch
        %160 = sbr.rel (%p157) target = $region12
      $region11: #{tpu_custom_call.1} parent=5 // pred_region
        %s161 = ssub.s32 %s16, 1
        // Predicated region
        $region13: #{tpu_custom_call.1} parent=11 // pred_check
          %p162 = pneg %p49
        $region14: #{tpu_custom_call.1} parent=11 // pred_check_branch
          %164 = sbr.rel (%p162) target = $region16
        $region15: #{tpu_custom_call.1} parent=11 // pred_region
          _
        $region16: #{tpu_custom_call.1} parent=11 // pred_fallthru
          _
        // Predicated region
        $region17: #{tpu_custom_call.1} parent=11 // pred_check
          %p165 = pneg %p70
        $region18: #{tpu_custom_call.1} parent=11 // pred_check_branch
          %167 = sbr.rel (%p165) target = $region20
        $region19: #{tpu_custom_call.1} parent=11 // pred_region
          _
        $region20: #{tpu_custom_call.1} parent=11 // pred_fallthru
          _
        // Predicated region
        $region21: #{tpu_custom_call.1} parent=11 // pred_check
          %p168 = pneg %p91
        $region22: #{tpu_custom_call.1} parent=11 // pred_check_branch
          %170 = sbr.rel (%p168) target = $region24
        $region23: #{tpu_custom_call.1} parent=11 // pred_region
          _
        $region24: #{tpu_custom_call.1} parent=11 // pred_fallthru
          _
      $region12: #{tpu_custom_call.1} parent=5 // pred_fallthru
        _
      %p171 = scmp.lt.s32.totalorder %s16, 2
      // Predicated region
      $region25: #{tpu_custom_call.1} parent=5 // pred_check
        %p172 = pneg %p171
      $region26: #{tpu_custom_call.1} parent=5 // pred_check_branch
        %174 = sbr.rel (%p172) target = $region28
      $region27: #{tpu_custom_call.1} parent=5 // pred_region
        // Predicated region
        $region29: #{tpu_custom_call.1} parent=27 // pred_check
          %p175 = pneg %p113
        $region30: #{tpu_custom_call.1} parent=27 // pred_check_branch
          %177 = sbr.rel (%p175) target = $region32
        $region31: #{tpu_custom_call.1} parent=27 // pred_region
          %s178 = sand.u32 %s103, 1
          %s179 = scalar_lea.sflag [#allocation3], %s178
          %s180 = sand.u32 %s103, 1
          %s181 = smul.addr %s180, 256
          %s182 = scalar_lea.vmem [#allocation2], %s181
          %s183 = smul.u32 4, %s24
          %s185 = ssub.s32 4096, 4096
          %186 = vsyncadd %s179, %s185
          %s187 = smul.addr %s23, 32
          %s188 = sadd.s32 %s183, %s187
          %s189 = smul.addr %s188, 128
          %s190 = scalar_lea.hbm %s3, %s189
          %s191 = sshll.u32 %s182, 4
          %s192 = int_to_ptr.vmem [resolvable:$true] %s191
          %197 = dma.hbm_to_vmem [thread:$0]  %s190, 4096, %s192, %s179, 512, 512, 32
        $region32: #{tpu_custom_call.1} parent=27 // pred_fallthru
          _
      $region28: #{tpu_custom_call.1} parent=5 // pred_fallthru
        _
      %p198 = scmp.le.s32.totalorder 1, %s16
      %p199 = scmp.lt.s32.totalorder %s16, 3
      %p200 = pnand %p198, %p199
      %p201 = pneg %p200
      // Predicated region
      $region33: #{tpu_custom_call.1} parent=5 // pred_check
        _
      $region34: #{tpu_custom_call.1} parent=5 // pred_check_branch
        %203 = sbr.rel (%p200) target = $region36
      $region35: #{tpu_custom_call.1} parent=5 // pred_region
        %s204 = ssub.s32 %s16, 1
        %s205 = sand.u32 %s106, 1
        %s206 = scalar_lea.sflag [#allocation3], %s205
        %s207 = sand.u32 %s106, 1
        %s208 = smul.addr %s207, 256
        %s209 = scalar_lea.vmem [#allocation2], %s208
        // Predicated region
        $region37: #{tpu_custom_call.1} parent=35 // pred_check
          %p210 = pneg %p119
        $region38: #{tpu_custom_call.1} parent=35 // pred_check_branch
          %212 = sbr.rel (%p210) target = $region40
        $region39: #{tpu_custom_call.1} parent=35 // pred_region
          %213 = dma.done %s206, 4096
        $region40: #{tpu_custom_call.1} parent=35 // pred_fallthru
          _
        %p214 = pneg %p49
        %p215 = pneg %p46
        %p216 = pneg %p70
        %p217 = pneg %p67
        %p218 = pneg %p91
        %p219 = pneg %p88
        %s220 = sand.u32 %s106, 1
        %s221 = scalar_lea.sflag [#allocation3], %s220
        %s222 = sand.u32 %s106, 1
        %s223 = smul.addr %s222, 256
        %s224 = scalar_lea.vmem [#allocation2], %s223
        %p225 = pneg %p119
        %p226 = pneg %p116
        %p227 = pneg %p147
        %p228 = pneg %p144
        %s229 = sand.u32 %s134, 1
        %s230 = scalar_lea.sflag [#allocation4], %s229
        %s231 = sand.u32 %s134, 1
        %s232 = smul.addr %s231, 32
        %s233 = scalar_lea.vmem [#allocation5], %s232
        %s234 = smul.u32 4, %s26
        %s235 = smul.u32 4, %s26
        %v236 = vld [vmem:[%s0] sm:$0xff]
        %v237 = vld [vmem:[%s209] sm:$0xff]
        %v238 = vld [vmem:[%s209 + $0x8] sm:$0xff]
        %v239 = vld [vmem:[%s209 + $0x10] sm:$0xff]
        %v240 = vld [vmem:[%s209 + $0x18] sm:$0xff]
        %v241 = vld [vmem:[%s209 + $0x20] sm:$0xff]
        %v242 = vld [vmem:[%s209 + $0x28] sm:$0xff]
        %v243 = vld [vmem:[%s209 + $0x30] sm:$0xff]
        %v244 = vld [vmem:[%s209 + $0x38] sm:$0xff]
        %v245 = vld [vmem:[%s209 + $0x40] sm:$0xff]
        %v246 = vld [vmem:[%s209 + $0x48] sm:$0xff]
        %v247 = vld [vmem:[%s209 + $0x50] sm:$0xff]
        %v248 = vld [vmem:[%s209 + $0x58] sm:$0xff]
        %v249 = vld [vmem:[%s209 + $0x60] sm:$0xff]
        %v250 = vld [vmem:[%s209 + $0x68] sm:$0xff]
        %v251 = vld [vmem:[%s209 + $0x70] sm:$0xff]
        %v252 = vld [vmem:[%s209 + $0x78] sm:$0xff]
        %v253 = vld [vmem:[%s209 + $0x80] sm:$0xff]
        %v254 = vld [vmem:[%s209 + $0x88] sm:$0xff]
        %v255 = vld [vmem:[%s209 + $0x90] sm:$0xff]
        %v256 = vld [vmem:[%s209 + $0x98] sm:$0xff]
        %v257 = vld [vmem:[%s209 + $0xa0] sm:$0xff]
        %v258 = vld [vmem:[%s209 + $0xa8] sm:$0xff]
        %v259 = vld [vmem:[%s209 + $0xb0] sm:$0xff]
        %v260 = vld [vmem:[%s209 + $0xb8] sm:$0xff]
        %v261 = vld [vmem:[%s209 + $0xc0] sm:$0xff]
        %v262 = vld [vmem:[%s209 + $0xc8] sm:$0xff]
        %v263 = vld [vmem:[%s209 + $0xd0] sm:$0xff]
        %v264 = vld [vmem:[%s209 + $0xd8] sm:$0xff]
        %v265 = vld [vmem:[%s209 + $0xe0] sm:$0xff]
        %v266 = vld [vmem:[%s209 + $0xe8] sm:$0xff]
        %v267 = vld [vmem:[%s209 + $0xf0] sm:$0xff]
        %v268 = vld [vmem:[%s209 + $0xf8] sm:$0xff]
        %vm269 = vcmask 523264
        %v271 = vsel %vm269, %v236, 0
        %273 = vmatprep.subr.mxu0 0.0
        %274 = vmatpush1.msra.mxu0 0.0
        %275 = vmatprep.subr.mxu0 0.0
        %276 = vmatpush1.msra.mxu0 0.0
        %277 = vmatprep.subr.mxu0 0.0
        %278 = vmatpush1.msra.mxu0 0.0
        %279 = vmatprep.subr.mxu0 0.0
        %280 = vmatpush1.msra.mxu0 0.0
        %281 = vmatprep.subr.mxu0 0.0
        %282 = vmatpush1.msra.mxu0 0.0
        %283 = vmatprep.subr.mxu0 0.0
        %284 = vmatpush1.msra.mxu0 0.0
        %285 = vmatprep.subr.mxu0 0.0
        %286 = vmatpush1.msra.mxu0 0.0
        %287 = vmatprep.subr.mxu0 0.0
        %288 = vmatpush1.msra.mxu0 0.0
        %289 = vmatprep.subr.mxu0 %v266
        %290 = vmatpush1.msra.mxu0 %v265
        %291 = vmatprep.subr.mxu0 %v262
        %292 = vmatpush1.msra.mxu0 %v261
        %293 = vmatprep.subr.mxu0 %v258
        %294 = vmatpush1.msra.mxu0 %v257
        %295 = vmatprep.subr.mxu0 %v254
        %296 = vmatpush1.msra.mxu0 %v253
        %297 = vmatprep.subr.mxu0 %v250
        %298 = vmatpush1.msra.mxu0 %v249
        %299 = vmatprep.subr.mxu0 %v246
        %300 = vmatpush1.msra.mxu0 %v245
        %301 = vmatprep.subr.mxu0 %v242
        %302 = vmatpush1.msra.mxu0 %v241
        %303 = vmatprep.subr.mxu0 %v238
        %304 = vmatpush1.msra.mxu0 %v237
        %305 = vmatprep.subr.mxu0 0.0
        %306 = vmatpush2.msra.mxu0 0.0
        %307 = vmatprep.subr.mxu0 0.0
        %308 = vmatpush2.msra.mxu0 0.0
        %309 = vmatprep.subr.mxu0 0.0
        %310 = vmatpush2.msra.mxu0 0.0
        %311 = vmatprep.subr.mxu0 0.0
        %312 = vmatpush2.msra.mxu0 0.0
        %313 = vmatprep.subr.mxu0 0.0
        %314 = vmatpush2.msra.mxu0 0.0
        %315 = vmatprep.subr.mxu0 0.0
        %316 = vmatpush2.msra.mxu0 0.0
        %317 = vmatprep.subr.mxu0 0.0
        %318 = vmatpush2.msra.mxu0 0.0
        %319 = vmatprep.subr.mxu0 0.0
        %320 = vmatpush2.msra.mxu0 0.0
        %321 = vmatprep.subr.mxu0 0.0
        %322 = vmatpush2.msra.mxu0 0.0
        %323 = vmatprep.subr.mxu0 0.0
        %324 = vmatpush2.msra.mxu0 0.0
        %325 = vmatprep.subr.mxu0 0.0
        %326 = vmatpush2.msra.mxu0 0.0
        %327 = vmatprep.subr.mxu0 0.0
        %328 = vmatpush2.msra.mxu0 0.0
        %329 = vmatprep.subr.mxu0 0.0
        %330 = vmatpush2.msra.mxu0 0.0
        %331 = vmatprep.subr.mxu0 0.0
        %332 = vmatpush2.msra.mxu0 0.0
        %333 = vmatprep.subr.mxu0 0.0
        %334 = vmatpush2.msra.mxu0 0.0
        %335 = vmatprep.subr.mxu0 0.0
        %336 = vmatpush2.msra.mxu0 0.0
        %337 = vmatprep.mubr.f32.mxu0 0.0
        %338 = vmatmul.mubr.f32.gmra.mxu0 %v271
        %v339 = vpop.f32.mrf.mxu0
        %v340 = vadd.f32 0.0, %v339
        %v341 = vpop.f32.mrf.mxu0
        %v342 = vadd.f32 0.0, %v341
        %343 = vdwg.mxu0
        %344 = vmatprep.subr.mxu0 0.0
        %345 = vmatpush1.msra.mxu0 0.0
        %346 = vmatprep.subr.mxu0 0.0
        %347 = vmatpush1.msra.mxu0 0.0
        %348 = vmatprep.subr.mxu0 0.0
        %349 = vmatpush1.msra.mxu0 0.0
        %350 = vmatprep.subr.mxu0 0.0
        %351 = vmatpush1.msra.mxu0 0.0
        %352 = vmatprep.subr.mxu0 0.0
        %353 = vmatpush1.msra.mxu0 0.0
        %354 = vmatprep.subr.mxu0 0.0
        %355 = vmatpush1.msra.mxu0 0.0
        %356 = vmatprep.subr.mxu0 0.0
        %357 = vmatpush1.msra.mxu0 0.0
        %358 = vmatprep.subr.mxu0 0.0
        %359 = vmatpush1.msra.mxu0 0.0
        %360 = vmatprep.subr.mxu0 %v268
        %361 = vmatpush1.msra.mxu0 %v267
        %362 = vmatprep.subr.mxu0 %v264
        %363 = vmatpush1.msra.mxu0 %v263
        %364 = vmatprep.subr.mxu0 %v260
        %365 = vmatpush1.msra.mxu0 %v259
        %366 = vmatprep.subr.mxu0 %v256
        %367 = vmatpush1.msra.mxu0 %v255
        %368 = vmatprep.subr.mxu0 %v252
        %369 = vmatpush1.msra.mxu0 %v251
        %370 = vmatprep.subr.mxu0 %v248
        %371 = vmatpush1.msra.mxu0 %v247
        %372 = vmatprep.subr.mxu0 %v244
        %373 = vmatpush1.msra.mxu0 %v243
        %374 = vmatprep.subr.mxu0 %v240
        %375 = vmatpush1.msra.mxu0 %v239
        %376 = vmatprep.subr.mxu0 0.0
        %377 = vmatpush2.msra.mxu0 0.0
        %378 = vmatprep.subr.mxu0 0.0
        %379 = vmatpush2.msra.mxu0 0.0
        %380 = vmatprep.subr.mxu0 0.0
        %381 = vmatpush2.msra.mxu0 0.0
        %382 = vmatprep.subr.mxu0 0.0
        %383 = vmatpush2.msra.mxu0 0.0
        %384 = vmatprep.subr.mxu0 0.0
        %385 = vmatpush2.msra.mxu0 0.0
        %386 = vmatprep.subr.mxu0 0.0
        %387 = vmatpush2.msra.mxu0 0.0
        %388 = vmatprep.subr.mxu0 0.0
        %389 = vmatpush2.msra.mxu0 0.0
        %390 = vmatprep.subr.mxu0 0.0
        %391 = vmatpush2.msra.mxu0 0.0
        %392 = vmatprep.subr.mxu0 0.0
        %393 = vmatpush2.msra.mxu0 0.0
        %394 = vmatprep.subr.mxu0 0.0
        %395 = vmatpush2.msra.mxu0 0.0
        %396 = vmatprep.subr.mxu0 0.0
        %397 = vmatpush2.msra.mxu0 0.0
        %398 = vmatprep.subr.mxu0 0.0
        %399 = vmatpush2.msra.mxu0 0.0
        %400 = vmatprep.subr.mxu0 0.0
        %401 = vmatpush2.msra.mxu0 0.0
        %402 = vmatprep.subr.mxu0 0.0
        %403 = vmatpush2.msra.mxu0 0.0
        %404 = vmatprep.subr.mxu0 0.0
        %405 = vmatpush2.msra.mxu0 0.0
        %406 = vmatprep.subr.mxu0 0.0
        %407 = vmatpush2.msra.mxu0 0.0
        %408 = vmatprep.mubr.f32.mxu0 0.0
        %409 = vmatmul.mubr.f32.gmra.mxu0 %v271
        %v410 = vpop.f32.mrf.mxu0
        %v411 = vadd.f32 0.0, %v410
        %v412 = vpop.f32.mrf.mxu0
        %v413 = vadd.f32 0.0, %v412
        %414 = vdwg.mxu0
        %v415 = vld [vmem:[%s1] sm:$0xff]
        %417 = vset.pattern.permute.xlu0 0
        %418 = vperm.xlu0 %417, %v415
        %v419 = vpop.permute.xlu0 %418
        %v421 = vmul.f32 %v340, %v419
        %v422 = vmul.f32 %v342, %v419
        %v423 = vmul.f32 %v411, %v419
        %v424 = vmul.f32 %v413, %v419
        %v425 = vld [vmem:[%s2] sm:$0xff]
        %427 = vset.pattern.permute.xlu0 0
        %428 = vperm.xlu0 %427, %v425
        %v429 = vpop.permute.xlu0 %428
        %v431 = vadd.f32 %v421, %v429
        %v432 = vadd.f32 %v422, %v429
        %v433 = vadd.f32 %v423, %v429
        %v434 = vadd.f32 %v424, %v429
        %v435 = vmax.f32 %v431, 0.0
        %v436 = vmax.f32 %v432, 0.0
        %v437 = vmax.f32 %v433, 0.0
        %v438 = vmax.f32 %v434, 0.0
        %439 = vst [vmem:[%s233] sm:$0xff] %v435
        %440 = vst [vmem:[%s233 + $0x8] sm:$0xff] %v436
        %441 = vst [vmem:[%s233 + $0x10] sm:$0xff] %v437
        %442 = vst [vmem:[%s233 + $0x18] sm:$0xff] %v438
        %s443 = sand.u32 %s134, 1
        %s444 = scalar_lea.sflag [#allocation4], %s443
        %s445 = sand.u32 %s134, 1
        %s446 = smul.addr %s445, 32
        %s447 = scalar_lea.vmem [#allocation5], %s446
        // Predicated region
        $region41: #{tpu_custom_call.1} parent=35 // pred_check
          %p448 = pneg %p144
        $region42: #{tpu_custom_call.1} parent=35 // pred_check_branch
          %450 = sbr.rel (%p448) target = $region44
        $region43: #{tpu_custom_call.1} parent=35 // pred_region
          %s451 = smul.u32 4, %s26
          %s453 = ssub.s32 512, 512
          %454 = vsyncadd %s444, %s453
          %s455 = smul.addr %s25, 4
          %s456 = sadd.s32 %s451, %s455
          %s457 = smul.addr %s456, 128
          %s458 = scalar_lea.hbm %s4, %s457
          %s460 = sshll.u32 %s447, 4
          %s461 = int_to_ptr.vmem [resolvable:$true] %s460
          %463 = dma.vmem_to_hbm [thread:$0]  %s461, 512, %s458, %s444
        $region44: #{tpu_custom_call.1} parent=35 // pred_fallthru
          _
      $region36: #{tpu_custom_call.1} parent=5 // pred_fallthru
        _
      %p464 = scmp.le.s32.totalorder 2, %s16
      // Predicated region
      $region45: #{tpu_custom_call.1} parent=5 // pred_check
        %p465 = pneg %p464
      $region46: #{tpu_custom_call.1} parent=5 // pred_check_branch
        %467 = sbr.rel (%p465) target = $region48
      $region47: #{tpu_custom_call.1} parent=5 // pred_region
        %s468 = ssub.s32 %s16, 2
        // Predicated region
        $region49: #{tpu_custom_call.1} parent=47 // pred_check
          %p469 = pneg %p150
        $region50: #{tpu_custom_call.1} parent=47 // pred_check_branch
          %471 = sbr.rel (%p469) target = $region52
        $region51: #{tpu_custom_call.1} parent=47 // pred_region
          %s472 = sand.u32 %s135, 1
          %s473 = scalar_lea.sflag [#allocation4], %s472
          %s474 = sand.u32 %s135, 1
          %s475 = smul.addr %s474, 32
          %s476 = scalar_lea.vmem [#allocation5], %s475
          %477 = dma.done %s473, 512
        $region52: #{tpu_custom_call.1} parent=47 // pred_fallthru
          _
      $region48: #{tpu_custom_call.1} parent=5 // pred_fallthru
        _
    $region6: #{tpu_custom_call.1} parent=1 // loop_footer
      %s20 = sadd.s32 1, %s16
    $region7: #{tpu_custom_call.1} parent=1 // loop_footer_branch
      %15 = sbr.rel target = $region3
    $region8: #{tpu_custom_call.1} parent=1 // loop_exit
      _
    %478 = vsyncpa [#allocation3], 1
    %s479 = scalar_lea.sflag [#allocation3], 1
    %480 = vsyncpa %s479, 1
    %481 = vsyncpa [#allocation4], 1
    %s482 = scalar_lea.sflag [#allocation4], 1
    %483 = vsyncpa %s482, 1

</llo_original>
